<compile_context>
chip_gen: v5e
topology: v5e:2x2
jax: 0.10.0
libtpu: 0.0.40
codegen_flags: <defaults>
</compile_context>

<pallas_src>
import jax
import jax.numpy as jnp
from jax.experimental import pallas as pl
from jax.experimental.pallas import tpu as pltpu


def matmul_relu_kernel(lhs_ref, w_ref, o_ref):
    # lhs_ref: (Mb, K)   im2col-by-rows activations
    # w_ref:   (K, Nout) expanded conv weights (PixelShuffle-ordered columns)
    # o_ref:   (Mb, Nout) lane-dense output (Nout multiple of 128)
    acc = jnp.dot(lhs_ref[...], w_ref[...], preferred_element_type=jnp.float32)
    o_ref[...] = jnp.maximum(acc, 0.0).astype(o_ref.dtype)


def _num_parallel_blocks():
    """2-way parallel M split on v7x (2 TensorCores); 1 on v5e/v6e."""
    try:
        kind = jax.devices()[0].device_kind.lower()
    except Exception:
        return 1
    return 2 if ("v7" in kind or "7x" in kind) else 1


def _build_row_conv_weights(weight_oihw, W, up_scale):
    """Expand (Cout, Cin, 3, 3) conv weights into a (3*(W+2)*Cin, out_ch*r*W*r)
    matrix so that the whole 3x3 'same' conv over one image row becomes one
    matmul, with output columns already in PixelShuffle order [c, i, w, j]."""
    Cout, Cin, KH, KW = weight_oihw.shape
    r = up_scale
    out_ch = Cout // (r * r)

    w_hwio = jnp.transpose(weight_oihw, (2, 3, 1, 0))          # (kh, kw, ci, co)

    # Shift matrix S[kw, wp, w] = 1  iff  wp == w + kw   (wp indexes padded width)
    wp = jnp.arange(W + 2)
    wo = jnp.arange(W)
    kw = jnp.arange(KW)
    S = (wp[None, :, None] == (wo[None, None, :] + kw[:, None, None]))
    S = S.astype(w_hwio.dtype)                                  # (3, W+2, W)

    # wbig[kh, wp, ci, w, co] = sum_kw S[kw, wp, w] * w_hwio[kh, kw, ci, co]
    wbig = jnp.einsum('kpw,hkco->hpcwo', S, w_hwio)             # (3, W+2, Cin, W, Cout)

    # Fold PixelShuffle into the column ordering: co = c*r*r + i*r + j,
    # reorder columns from [w, c, i, j] to [c, i, w, j].
    wbig = wbig.reshape(KH, W + 2, Cin, W, out_ch, r, r)        # (kh,wp,ci,w,c,i,j)
    wbig = jnp.transpose(wbig, (0, 1, 2, 4, 5, 3, 6))           # (kh,wp,ci,c,i,w,j)
    return wbig.reshape(KH * (W + 2) * Cin, out_ch * r * W * r)


def upsample_pixel_shuffle(x_nchw, weight_oihw, up_scale=2):
    """Equivalent of UpSamplePixelShuffle.forward (NCHW in, NCHW out)."""
    N, Cin, H, W = x_nchw.shape
    Cout = weight_oihw.shape[0]                                 # out_ch * r * r
    r = up_scale
    out_ch = Cout // (r * r)

    K = 3 * (W + 2) * Cin                                       # 216
    M = N * H                                                   # 32
    Nout = out_ch * r * W * r                                   # 256 (lane-dense)

    # ---- LHS: rows of the zero-padded image, 3 consecutive rows per output row.
    x_nhwc = jnp.transpose(x_nchw, (0, 2, 3, 1))                # (N,H,W,Cin)
    x_pad = jnp.pad(x_nhwc, ((0, 0), (1, 1), (1, 1), (0, 0)))   # (N,H+2,W+2,Cin)
    x_rows = x_pad.reshape(N, H + 2, (W + 2) * Cin)             # (N,H+2,(W+2)*Cin)
    lhs = jnp.concatenate(
        [x_rows[:, 0:H], x_rows[:, 1:H + 1], x_rows[:, 2:H + 2]], axis=-1)
    lhs = lhs.reshape(M, K)                                     # (32, 216)

    # ---- RHS: expanded, PixelShuffle-ordered weights (static per layer).
    wbig = _build_row_conv_weights(weight_oihw, W, up_scale)    # (216, 256)
    wbig = wbig.astype(x_nchw.dtype)

    # ---- Grid: 1 block on single-TC chips, 2-way parallel split of M on v7x.
    nblk = _num_parallel_blocks()
    if M % (nblk * 8) != 0:
        nblk = 1
    Mb = M // nblk

    out2d = pl.pallas_call(
        matmul_relu_kernel,
        out_shape=jax.ShapeDtypeStruct((M, Nout), x_nchw.dtype),
        grid_spec=pltpu.PrefetchScalarGridSpec(
            num_scalar_prefetch=0,
            grid=(nblk,),
            in_specs=[
                pl.BlockSpec((Mb, K), lambda i: (i, 0)),
                pl.BlockSpec((K, Nout), lambda i: (0, 0)),
            ],
            out_specs=pl.BlockSpec((Mb, Nout), lambda i: (i, 0)),
        ),
        compiler_params=pltpu.CompilerParams(
            dimension_semantics=("parallel",)),
    )(lhs, wbig)

    # ---- Epilogue: columns are already [c, i, w, j]; one transpose finishes
    # the PixelShuffle into NCHW.
    out = out2d.reshape(N, H, out_ch, r, W, r)                  # (n,h,c,i,w,j)
    out = jnp.transpose(out, (0, 2, 1, 3, 4, 5))                # (n,c,h,i,w,j)
    return out.reshape(N, out_ch, H * r, W * r)


def _reference(x_nchw, weight_oihw, up_scale=2):
    """Pure-JAX reference matching PyTorch semantics (for validation)."""
    N, Cin, H, W = x_nchw.shape
    r = up_scale
    out_ch = weight_oihw.shape[0] // (r * r)
    y = jax.lax.conv_general_dilated(
        x_nchw, weight_oihw, window_strides=(1, 1), padding="SAME",
        dimension_numbers=("NCHW", "OIHW", "NCHW"))
    y = y.reshape(N, out_ch, r, r, H, W)
    y = jnp.transpose(y, (0, 1, 4, 2, 5, 3)).reshape(N, out_ch, H * r, W * r)
    return jnp.maximum(y, 0.0)


if __name__ == "__main__":
    # Module config: in_ch=4, out_ch=4, up_scale=2 -> conv out channels = 16
    in_ch, out_ch, up_scale = 4, 4, 2
    N, H, W = 2, 16, 16

    key = jax.random.PRNGKey(0)
    kx, kw = jax.random.split(key)
    x = jax.random.normal(kx, (N, in_ch, H, W), dtype=jnp.float32)
    # Conv2d weight shape (out_ch*r*r, in_ch, 3, 3), deterministic init.
    weight = 0.1 * jax.random.normal(
        kw, (out_ch * up_scale * up_scale, in_ch, 3, 3), dtype=jnp.float32)

    out = upsample_pixel_shuffle(x, weight, up_scale)
    out = jax.block_until_ready(out)

    ref = _reference(x, weight, up_scale)
    assert out.shape == (N, out_ch, H * up_scale, W * up_scale), out.shape
    assert jnp.allclose(out, ref, atol=1e-4, rtol=1e-4), "mismatch vs reference"

    print("KERNEL_OK")
</pallas_src>

<mosaic_0001>
module attributes {stable_mosaic.version = 11 : i64} {
  func.func @matmul_relu_kernel(%arg0: i32, %arg1: memref<32x216xf32, #tpu.memory_space<vmem>>, %arg2: memref<216x256xf32, #tpu.memory_space<vmem>>, %arg3: memref<32x256xf32, #tpu.memory_space<vmem>>) attributes {dimension_semantics = [#tpu.dimension_semantics<parallel>], iteration_bounds = array<i64: 1>, scalar_prefetch = 0 : i64, scratch_operands = 0 : i64, tpu.core_type = #tpu.core_type<tc>, window_params = [{transform_indices = @transform_0, window_bounds = array<i64: 32, 216>}, {pipeline_mode = #tpu.pipeline_mode<synchronous>, transform_indices = @transform_1, window_bounds = array<i64: 216, 256>}, {transform_indices = @transform_2, window_bounds = array<i64: 32, 256>}]} {
    %c0 = arith.constant 0 : index
    %c0_0 = arith.constant 0 : index
    %0 = vector.load %arg1[%c0, %c0_0] : memref<32x216xf32, #tpu.memory_space<vmem>>, vector<32x216xf32>
    %c0_1 = arith.constant 0 : index
    %c0_2 = arith.constant 0 : index
    %1 = vector.load %arg2[%c0_1, %c0_2] : memref<216x256xf32, #tpu.memory_space<vmem>>, vector<216x256xf32>
    %cst = arith.constant dense<0.000000e+00> : vector<32x256xf32>
    %2 = tpu.matmul %0, %1, %cst {dimension_numbers = #tpu.dot_dimension_numbers<[1], [0], [0], [1], [0, 0, 1, 1], [], []>} : vector<32x216xf32>, vector<216x256xf32>, vector<32x256xf32> -> vector<32x256xf32>
    %cst_3 = arith.constant 0.000000e+00 : f32
    %3 = vector.broadcast %cst_3 : f32 to vector<32x256xf32>
    %4 = arith.maximumf %2, %3 : vector<32x256xf32>
    %c0_4 = arith.constant 0 : index
    %c0_5 = arith.constant 0 : index
    %5 = vector.load %arg3[%c0_4, %c0_5] : memref<32x256xf32, #tpu.memory_space<vmem>>, vector<32x256xf32>
    tpu.vector_store %arg3[%c0_4, %c0_5], %4 {strides = array<i32>} : memref<32x256xf32, #tpu.memory_space<vmem>>, vector<32x256xf32>,
    return
  }
  func.func @transform_0(%arg0: i32) -> (i32, i32) {
    %c0_i32 = arith.constant 0 : i32
    %c0_i32_0 = arith.constant 0 : i32
    return %arg0, %c0_i32 : i32, i32
  }
  func.func @transform_1(%arg0: i32) -> (i32, i32) {
    %c0_i32 = arith.constant 0 : i32
    %c0_i32_0 = arith.constant 0 : i32
    %c0_i32_1 = arith.constant 0 : i32
    return %c0_i32, %c0_i32_0 : i32, i32
  }
  func.func @transform_2(%arg0: i32) -> (i32, i32) {
    %c0_i32 = arith.constant 0 : i32
    %c0_i32_0 = arith.constant 0 : i32
    return %arg0, %c0_i32 : i32, i32
  }
}

</mosaic_0001>

<llo_original>
// kernel: tpu_custom_call.1
$region0: #{tpu_custom_call.1}
  #allocation0 [shape = 'u32[]', space=smem, size = 0x4, offset = 0x4, fixed_abs, tag = 'smem constant byte address 0x4 - core index']
  #allocation1 [shape = 'u32[72,128]{1,0:T(1,128)}', space=vmem, size = 0x9000, scoped, tag = 'internal scratch']
  %s0 = inlined_call_operand.hbm [shape: f32[32,216], index: 0, kind: input, shape index: {}]
  %s1 = inlined_call_operand.hbm [shape: f32[216,256], index: 1, kind: input, shape index: {}]
  %s2 = inlined_call_operand.hbm [shape: f32[32,256], index: 2, kind: output, shape index: {}]
  %s3 = sld [smem:[#allocation0]]
  $region26: #{tpu_custom_call.1} parent=0
    _
  %s5 = ssub.s32 1, %s3
  %s6 = scalar_select 0, %s5, %s3
  $region1: #{tpu_custom_call.1} parent=0
    #allocation2 [shape = 'u8[32768]{0}', space=vmem, size = 0x8000, scoped, tag = 'input window, operand 0, single buffered']
    #allocation3 [shape = 's32[1]{0}', space=sflag, size = 0x4, scoped, tag = 'scoped memory for tpu_custom_call.1']
    #allocation4 [shape = 's32[1]{0}', space=sflag, size = 0x4, scoped, tag = 'scoped memory for tpu_custom_call.1']
    #allocation5 [shape = 'u8[221184]{0}', space=vmem, size = 0x36000, scoped, tag = 'input window, operand 1, single buffered']
    #allocation6 [shape = 's32[1]{0}', space=sflag, size = 0x4, scoped, tag = 'scoped memory for tpu_custom_call.1']
    #allocation7 [shape = 'u8[32768]{0}', space=vmem, size = 0x8000, scoped, tag = 'output window, operand 0, single buffered']
    %7 = vsyncpa [#allocation3], 0
    %8 = vsyncpa [#allocation6], 0
    %9 = vsyncpa [#allocation4], 0
    // Predicated region
    $region2: #{tpu_custom_call.1} parent=1 // pred_check
      _
    $region3: #{tpu_custom_call.1} parent=1 // pred_check_branch
      %11 = sbr.rel (0) target = $region5
    $region4: #{tpu_custom_call.1} parent=1 // pred_region
      %13 = vsyncadd [#allocation3], 0
      %s14 = sshll.u32 %s0, 4
      %s15 = int_to_ptr.hbm [resolvable:$true] %s14
      %s16 = sshll.u32 [#allocation2], 4
      %s17 = int_to_ptr.vmem [resolvable:$true] %s16
      %22 = dma.hbm_to_vmem [thread:$0]  %s15, 1024, %s17, [#allocation3], 256, 256, 16
    $region5: #{tpu_custom_call.1} parent=1 // pred_fallthru
      _
    // Predicated region
    $region6: #{tpu_custom_call.1} parent=1 // pred_check
      _
    $region7: #{tpu_custom_call.1} parent=1 // pred_check_branch
      %24 = sbr.rel (0) target = $region9
    $region8: #{tpu_custom_call.1} parent=1 // pred_region
      %26 = vsyncadd [#allocation6], 0
      %s27 = sshll.u32 %s1, 4
      %s28 = int_to_ptr.hbm [resolvable:$true] %s27
      %s29 = sshll.u32 [#allocation5], 4
      %s30 = int_to_ptr.vmem [resolvable:$true] %s29
      %35 = dma.hbm_to_vmem [thread:$0]  %s28, 6912, %s30, [#allocation6], 256, 256, 16
    $region9: #{tpu_custom_call.1} parent=1 // pred_fallthru
      _
    // Predicated region
    $region10: #{tpu_custom_call.1} parent=1 // pred_check
      _
    $region11: #{tpu_custom_call.1} parent=1 // pred_check_branch
      %37 = sbr.rel (0) target = $region13
    $region12: #{tpu_custom_call.1} parent=1 // pred_region
      %39 = dma.done [#allocation3], 1024
    $region13: #{tpu_custom_call.1} parent=1 // pred_fallthru
      _
    // Predicated region
    $region14: #{tpu_custom_call.1} parent=1 // pred_check
      _
    $region15: #{tpu_custom_call.1} parent=1 // pred_check_branch
      %41 = sbr.rel (0) target = $region17
    $region16: #{tpu_custom_call.1} parent=1 // pred_region
      %43 = dma.done [#allocation6], 6912
    $region17: #{tpu_custom_call.1} parent=1 // pred_fallthru
      _
    %v44 = vld [vmem:[#allocation2] sm:$0xff]
    %v45 = vld [vmem:[#allocation2 + $0x8] sm:$0xff]
    %v46 = vld [vmem:[#allocation2 + $0x10] sm:$0xff]
    %v47 = vld [vmem:[#allocation2 + $0x18] sm:$0xff]
    %v48 = vld [vmem:[#allocation2 + $0x20] sm:$0xff]
    %v49 = vld [vmem:[#allocation2 + $0x28] sm:$0xff]
    %v50 = vld [vmem:[#allocation2 + $0x30] sm:$0xff]
    %v51 = vld [vmem:[#allocation2 + $0x38] sm:$0xff]
    %v52 = vld [vmem:[#allocation5] sm:$0xff]
    %v53 = vld [vmem:[#allocation5 + $0x8] sm:$0xff]
    %v54 = vld [vmem:[#allocation5 + $0x10] sm:$0xff]
    %v55 = vld [vmem:[#allocation5 + $0x18] sm:$0xff]
    %v56 = vld [vmem:[#allocation5 + $0x20] sm:$0xff]
    %v57 = vld [vmem:[#allocation5 + $0x28] sm:$0xff]
    %v58 = vld [vmem:[#allocation5 + $0x30] sm:$0xff]
    %v59 = vld [vmem:[#allocation5 + $0x38] sm:$0xff]
    %v60 = vld [vmem:[#allocation5 + $0x40] sm:$0xff]
    %v61 = vld [vmem:[#allocation5 + $0x48] sm:$0xff]
    %v62 = vld [vmem:[#allocation5 + $0x50] sm:$0xff]
    %v63 = vld [vmem:[#allocation5 + $0x58] sm:$0xff]
    %v64 = vld [vmem:[#allocation5 + $0x60] sm:$0xff]
    %v65 = vld [vmem:[#allocation5 + $0x68] sm:$0xff]
    %v66 = vld [vmem:[#allocation5 + $0x70] sm:$0xff]
    %v67 = vld [vmem:[#allocation5 + $0x78] sm:$0xff]
    %v68 = vld [vmem:[#allocation5 + $0x80] sm:$0xff]
    %v69 = vld [vmem:[#allocation5 + $0x88] sm:$0xff]
    %v70 = vld [vmem:[#allocation5 + $0x90] sm:$0xff]
    %v71 = vld [vmem:[#allocation5 + $0x98] sm:$0xff]
    %v72 = vld [vmem:[#allocation5 + $0xa0] sm:$0xff]
    %v73 = vld [vmem:[#allocation5 + $0xa8] sm:$0xff]
    %v74 = vld [vmem:[#allocation5 + $0xb0] sm:$0xff]
    %v75 = vld [vmem:[#allocation5 + $0xb8] sm:$0xff]
    %v76 = vld [vmem:[#allocation5 + $0xc0] sm:$0xff]
    %v77 = vld [vmem:[#allocation5 + $0xc8] sm:$0xff]
    %v78 = vld [vmem:[#allocation5 + $0xd0] sm:$0xff]
    %v79 = vld [vmem:[#allocation5 + $0xd8] sm:$0xff]
    %v80 = vld [vmem:[#allocation5 + $0xe0] sm:$0xff]
    %v81 = vld [vmem:[#allocation5 + $0xe8] sm:$0xff]
    %v82 = vld [vmem:[#allocation5 + $0xf0] sm:$0xff]
    %v83 = vld [vmem:[#allocation5 + $0xf8] sm:$0xff]
    %v84 = vld [vmem:[#allocation5 + $0x100] sm:$0xff]
    %v85 = vld [vmem:[#allocation5 + $0x108] sm:$0xff]
    %v86 = vld [vmem:[#allocation5 + $0x110] sm:$0xff]
    %v87 = vld [vmem:[#allocation5 + $0x118] sm:$0xff]
    %v88 = vld [vmem:[#allocation5 + $0x120] sm:$0xff]
    %v89 = vld [vmem:[#allocation5 + $0x128] sm:$0xff]
    %v90 = vld [vmem:[#allocation5 + $0x130] sm:$0xff]
    %v91 = vld [vmem:[#allocation5 + $0x138] sm:$0xff]
    %v92 = vld [vmem:[#allocation5 + $0x140] sm:$0xff]
    %v93 = vld [vmem:[#allocation5 + $0x148] sm:$0xff]
    %v94 = vld [vmem:[#allocation5 + $0x150] sm:$0xff]
    %v95 = vld [vmem:[#allocation5 + $0x158] sm:$0xff]
    %v96 = vld [vmem:[#allocation5 + $0x160] sm:$0xff]
    %v97 = vld [vmem:[#allocation5 + $0x168] sm:$0xff]
    %v98 = vld [vmem:[#allocation5 + $0x170] sm:$0xff]
    %v99 = vld [vmem:[#allocation5 + $0x178] sm:$0xff]
    %v100 = vld [vmem:[#allocation5 + $0x180] sm:$0xff]
    %v101 = vld [vmem:[#allocation5 + $0x188] sm:$0xff]
    %v102 = vld [vmem:[#allocation5 + $0x190] sm:$0xff]
    %v103 = vld [vmem:[#allocation5 + $0x198] sm:$0xff]
    %v104 = vld [vmem:[#allocation5 + $0x1a0] sm:$0xff]
    %v105 = vld [vmem:[#allocation5 + $0x1a8] sm:$0xff]
    %vm106 = vcmask 719872
    %v108 = vsel %vm106, %v45, 0
    %v111 = vsel %vm106, %v47, 0
    %v114 = vsel %vm106, %v49, 0
    %v117 = vsel %vm106, %v51, 0
    %119 = vmatpush.msra.mxu0 %v82
    %120 = vmatpush.msra.mxu0 %v80
    %121 = vmatpush.msra.mxu0 %v78
    %122 = vmatpush.msra.mxu0 %v76
    %123 = vmatpush.msra.mxu0 %v74
    %124 = vmatpush.msra.mxu0 %v72
    %125 = vmatpush.msra.mxu0 %v70
    %126 = vmatpush.msra.mxu0 %v68
    %127 = vmatpush.msra.mxu0 %v66
    %128 = vmatpush.msra.mxu0 %v64
    %129 = vmatpush.msra.mxu0 %v62
    %130 = vmatpush.msra.mxu0 %v60
    %131 = vmatpush.msra.mxu0 %v58
    %132 = vmatpush.msra.mxu0 %v56
    %133 = vmatpush.msra.mxu0 %v54
    %134 = vmatpush.msra.mxu0 %v52
    %135 = vmatmul.f32.gmra.mxu0 %v44
    %v136 = vpop.f32.mrf.mxu0
    %v137 = vadd.f32 0.0, %v136
    %138 = vmatmul.f32.gmra.mxu0 %v46
    %v139 = vpop.f32.mrf.mxu0
    %v140 = vadd.f32 0.0, %v139
    %141 = vmatmul.f32.gmra.mxu0 %v48
    %v142 = vpop.f32.mrf.mxu0
    %v143 = vadd.f32 0.0, %v142
    %144 = vmatmul.f32.gmra.mxu0 %v50
    %v145 = vpop.f32.mrf.mxu0
    %v146 = vadd.f32 0.0, %v145
    %147 = vdwg.mxu0
    %148 = vmatpush.msra.mxu0 0.0
    %149 = vmatpush.msra.mxu0 0.0
    %150 = vmatpush.msra.mxu0 0.0
    %151 = vmatpush.msra.mxu0 0.0
    %152 = vmatpush.msra.mxu0 0.0
    %153 = vmatpush.msra.mxu0 %v104
    %154 = vmatpush.msra.mxu0 %v102
    %155 = vmatpush.msra.mxu0 %v100
    %156 = vmatpush.msra.mxu0 %v98
    %157 = vmatpush.msra.mxu0 %v96
    %158 = vmatpush.msra.mxu0 %v94
    %159 = vmatpush.msra.mxu0 %v92
    %160 = vmatpush.msra.mxu0 %v90
    %161 = vmatpush.msra.mxu0 %v88
    %162 = vmatpush.msra.mxu0 %v86
    %163 = vmatpush.msra.mxu0 %v84
    %164 = vmatmul.f32.gmra.mxu0 %v108
    %v165 = vpop.f32.mrf.mxu0
    %v166 = vadd.f32 %v137, %v165
    %167 = vmatmul.f32.gmra.mxu0 %v111
    %v168 = vpop.f32.mrf.mxu0
    %v169 = vadd.f32 %v140, %v168
    %170 = vmatmul.f32.gmra.mxu0 %v114
    %v171 = vpop.f32.mrf.mxu0
    %v172 = vadd.f32 %v143, %v171
    %173 = vmatmul.f32.gmra.mxu0 %v117
    %v174 = vpop.f32.mrf.mxu0
    %v175 = vadd.f32 %v146, %v174
    %176 = vdwg.mxu0
    %177 = vmatpush.msra.mxu0 %v83
    %178 = vmatpush.msra.mxu0 %v81
    %179 = vmatpush.msra.mxu0 %v79
    %180 = vmatpush.msra.mxu0 %v77
    %181 = vmatpush.msra.mxu0 %v75
    %182 = vmatpush.msra.mxu0 %v73
    %183 = vmatpush.msra.mxu0 %v71
    %184 = vmatpush.msra.mxu0 %v69
    %185 = vmatpush.msra.mxu0 %v67
    %186 = vmatpush.msra.mxu0 %v65
    %187 = vmatpush.msra.mxu0 %v63
    %188 = vmatpush.msra.mxu0 %v61
    %189 = vmatpush.msra.mxu0 %v59
    %190 = vmatpush.msra.mxu0 %v57
    %191 = vmatpush.msra.mxu0 %v55
    %192 = vmatpush.msra.mxu0 %v53
    %193 = vmatmul.f32.gmra.mxu0 %v44
    %v194 = vpop.f32.mrf.mxu0
    %v195 = vadd.f32 0.0, %v194
    %196 = vmatmul.f32.gmra.mxu0 %v46
    %v197 = vpop.f32.mrf.mxu0
    %v198 = vadd.f32 0.0, %v197
    %199 = vmatmul.f32.gmra.mxu0 %v48
    %v200 = vpop.f32.mrf.mxu0
    %v201 = vadd.f32 0.0, %v200
    %202 = vmatmul.f32.gmra.mxu0 %v50
    %v203 = vpop.f32.mrf.mxu0
    %v204 = vadd.f32 0.0, %v203
    %205 = vdwg.mxu0
    %206 = vmatpush.msra.mxu0 0.0
    %207 = vmatpush.msra.mxu0 0.0
    %208 = vmatpush.msra.mxu0 0.0
    %209 = vmatpush.msra.mxu0 0.0
    %210 = vmatpush.msra.mxu0 0.0
    %211 = vmatpush.msra.mxu0 %v105
    %212 = vmatpush.msra.mxu0 %v103
    %213 = vmatpush.msra.mxu0 %v101
    %214 = vmatpush.msra.mxu0 %v99
    %215 = vmatpush.msra.mxu0 %v97
    %216 = vmatpush.msra.mxu0 %v95
    %217 = vmatpush.msra.mxu0 %v93
    %218 = vmatpush.msra.mxu0 %v91
    %219 = vmatpush.msra.mxu0 %v89
    %220 = vmatpush.msra.mxu0 %v87
    %221 = vmatpush.msra.mxu0 %v85
    %222 = vmatmul.f32.gmra.mxu0 %v108
    %v223 = vpop.f32.mrf.mxu0
    %v224 = vadd.f32 %v195, %v223
    %225 = vmatmul.f32.gmra.mxu0 %v111
    %v226 = vpop.f32.mrf.mxu0
    %v227 = vadd.f32 %v198, %v226
    %228 = vmatmul.f32.gmra.mxu0 %v114
    %v229 = vpop.f32.mrf.mxu0
    %v230 = vadd.f32 %v201, %v229
    %231 = vmatmul.f32.gmra.mxu0 %v117
    %v232 = vpop.f32.mrf.mxu0
    %v233 = vadd.f32 %v204, %v232
    %234 = vdwg.mxu0
    %v235 = vmax.f32 %v166, 0.0
    %v236 = vmax.f32 %v224, 0.0
    %v237 = vmax.f32 %v169, 0.0
    %v238 = vmax.f32 %v227, 0.0
    %v239 = vmax.f32 %v172, 0.0
    %v240 = vmax.f32 %v230, 0.0
    %v241 = vmax.f32 %v175, 0.0
    %v242 = vmax.f32 %v233, 0.0
    %243 = vst [vmem:[#allocation7] sm:$0xff] %v235
    %244 = vst [vmem:[#allocation7 + $0x8] sm:$0xff] %v236
    %245 = vst [vmem:[#allocation7 + $0x10] sm:$0xff] %v237
    %246 = vst [vmem:[#allocation7 + $0x18] sm:$0xff] %v238
    %247 = vst [vmem:[#allocation7 + $0x20] sm:$0xff] %v239
    %248 = vst [vmem:[#allocation7 + $0x28] sm:$0xff] %v240
    %249 = vst [vmem:[#allocation7 + $0x30] sm:$0xff] %v241
    %250 = vst [vmem:[#allocation7 + $0x38] sm:$0xff] %v242
    // Predicated region
    $region18: #{tpu_custom_call.1} parent=1 // pred_check
      _
    $region19: #{tpu_custom_call.1} parent=1 // pred_check_branch
      %252 = sbr.rel (0) target = $region21
    $region20: #{tpu_custom_call.1} parent=1 // pred_region
      %254 = vsyncadd [#allocation4], 0
      %s255 = sshll.u32 [#allocation7], 4
      %s256 = int_to_ptr.vmem [resolvable:$true] %s255
      %s257 = sshll.u32 %s2, 4
      %s258 = int_to_ptr.hbm [resolvable:$true] %s257
      %263 = dma.vmem_to_hbm [thread:$0]  %s256, 1024, %s258, [#allocation4], 256, 256, 16
    $region21: #{tpu_custom_call.1} parent=1 // pred_fallthru
      _
    // Predicated region
    $region22: #{tpu_custom_call.1} parent=1 // pred_check
      _
    $region23: #{tpu_custom_call.1} parent=1 // pred_check_branch
      %265 = sbr.rel (0) target = $region25
    $region24: #{tpu_custom_call.1} parent=1 // pred_region
      %267 = dma.done [#allocation4], 1024
    $region25: #{tpu_custom_call.1} parent=1 // pred_fallthru
      _
    %268 = vsyncpa [#allocation3], 1
    %269 = vsyncpa [#allocation6], 1
    %270 = vsyncpa [#allocation4], 1

</llo_original>
